<compile_context>
chip_gen: v5e
topology: v5e:2x2
jax: 0.10.0
libtpu: 0.0.40
codegen_flags: <defaults>
</compile_context>

<pallas_src>
import functools

import jax
import jax.numpy as jnp
import numpy as np
from jax import lax
from jax.experimental import pallas as pl
from jax.experimental.pallas import tpu as pltpu


def _round_up(x, m):
    return (x + m - 1) // m * m


@functools.lru_cache(maxsize=None)
def _pltpu_roll_is_jnp_convention() -> bool:
    """One-time device probe of pltpu.roll's shift convention (expected: same as jnp.roll,
    out[i] = in[i - shift]).  Guards the conv tap direction against convention drift.
    NOTE: runs a real pallas_call; under interpret/CPU fallback it reflects the emulator,
    which is acceptable because the main kernel would run there too."""
    def _k(x_ref, o_ref):
        o_ref[...] = pltpu.roll(x_ref[...], shift=1, axis=1)

    x = np.tile(np.arange(128, dtype=np.float32)[None, :], (8, 1))
    out = pl.pallas_call(_k, out_shape=jax.ShapeDtypeStruct((8, 128), jnp.float32))(x)
    return bool(np.asarray(out)[0, 1] == 0.0)


@functools.lru_cache(maxsize=None)
def _device_kind() -> str:
    try:
        return jax.devices()[0].device_kind.lower()
    except Exception:
        return ""


def _vmem_budgets():
    """(compiler vmem_limit_bytes, block-sizing budget) -- generation aware."""
    kind = _device_kind()
    if "v7" in kind:                      # 64 MiB physical VMEM, 2 TensorCores
        limit, budget = 48 << 20, 28 << 20
    elif "v5" in kind or "v6" in kind:    # 128 MiB physical VMEM
        limit, budget = 64 << 20, 40 << 20
    else:                                 # unknown chip: stay at the safe default
        limit, budget = 32 << 20, 20 << 20
    try:  # refine with the real capacity when the query is available
        cap = int(pltpu.get_tpu_info().vmem_capacity_bytes)
        limit = min(limit, int(cap * 0.75))
        budget = min(budget, int(cap * 0.45))
    except Exception:
        pass
    return limit, budget


def _pick_batch_block(n, per_image_bytes, fixed_bytes, budget_bytes, max_nb=8):
    """Largest divisor of n (<= max_nb, keeping the unrolled per-image loop small) whose
    block fits the VMEM budget, preferring grid >= 2 so both TensorCores get work on v7x."""
    divisors = [d for d in range(1, min(n, max_nb) + 1) if n % d == 0]
    fits = [d for d in divisors if fixed_bytes + d * per_image_bytes <= budget_bytes] or [1]
    pref = [d for d in fits if n // d >= 2]
    return max(pref) if pref else max(fits)


def _musco_tucker_kernel(x_ref, wc_ref, wk_ref, wr_ref, b_ref, m_ref, o_ref,
                         y1_ref, cols_ref, *,
                         H, W, KH, KW, PH, PW, NB, rin_p,
                         compute_dtype, elem_dtype, roll_forward):
    """Processes one batch block of NB images, lane-batched as (C, NB*HW) slabs.

    x_ref  : (NB, Cin, HW)            f32 activations (NCHW, spatial flattened to lanes)
    wc_ref : (Rin_p, Cin)             compress weight           (compute_dtype)
    wk_ref : (Rout_p, KH*KW*Rin_p)    core weight, im2col layout (compute_dtype)
    wr_ref : (Cout, Rout_p)           restore weight             (compute_dtype)
    b_ref  : (Cout, 1)                restore bias (f32)
    m_ref  : (KH*KW-1, 1, NB*HW)      per-tap 0/1 border masks, non-center taps (elem_dtype)
    o_ref  : (NB, Cout, HW)           output (f32)
    y1_ref : (Rin_p, NB*HW)           scratch: compressed activations slab (elem_dtype)
    cols_ref:(KH*KW*Rin_p, NB*HW)     scratch: im2col columns slab (compute_dtype)
    """
    HW = H * W
    L = NB * HW

    wc = wc_ref[...]                                        # hoisted once per grid step

    # ---- Stage 1: compress 1x1 conv == one lane-dense matmul per image, written
    #      side-by-side along lanes into the (Rin_p, NB*HW) slab.
    for n in range(NB):
        x = x_ref[n].astype(compute_dtype)                  # (Cin, HW)
        y1 = jnp.dot(wc, x, preferred_element_type=jnp.float32)   # (Rin_p, HW) f32
        y1_ref[:, n * HW:(n + 1) * HW] = y1.astype(elem_dtype)

    y1_big = y1_ref[...]                                    # (Rin_p, L)

    # ---- Stage 2: im2col over taps via lane rolls (XLU) + precomputed border masks.
    # Rolling the whole NB-slab is valid: every lane the roll wraps across a row, an
    # image, or the slab boundary is exactly a mask-invalid lane ('same' zero padding,
    # stride=1, dilation=1, odd K).  Center tap mask is all ones -> no multiply.
    cols_ref[0:rin_p, :] = y1_big.astype(compute_dtype)
    t = 0
    for ky in range(KH):
        for kx in range(KW):
            if ky == PH and kx == PW:
                continue
            s = (ky - PH) * W + (kx - PW)                   # flat spatial offset of this tap
            shift = ((-s) % L) if roll_forward else (s % L)
            shifted = pltpu.roll(y1_big, shift=shift, axis=1)
            masked = shifted * m_ref[t]                     # mask broadcast over sublanes
            cols_ref[(t + 1) * rin_p:(t + 2) * rin_p, :] = masked.astype(compute_dtype)
            t += 1

    # ---- Stage 3: ONE core matmul (K = KH*KW*Rin_p) and ONE restore matmul + bias
    #      over the whole NB*HW lane-batched slab.
    core = jnp.dot(wk_ref[...], cols_ref[...],
                   preferred_element_type=jnp.float32)                    # (Rout_p, L)
    out = jnp.dot(wr_ref[...], core.astype(compute_dtype),
                  preferred_element_type=jnp.float32) + b_ref[...]        # (Cout, L)
    out = out.astype(o_ref.dtype)

    # ---- Stage 4: full-lane stores, one per image.
    for n in range(NB):
        o_ref[n] = out[:, n * HW:(n + 1) * HW]


def musco_tucker_forward(x_nchw, wc, wk, wr, b, *,
                         compute_dtype=None, elementwise_dtype=None):
    """x_nchw: (N, Cin, H, W) f32 -> (N, Cout, H, W) f32 (PyTorch NCHW semantics).

    wc: (Cin, Rin)            from torch compress weight (Rin, Cin, 1, 1)
    wk: (KH, KW, Rin, Rout)   from torch core weight     (Rout, Rin, KH, KW)
    wr: (Rout, Cout)          from torch restore weight  (Cout, Rout, 1, 1)
    b : (Cout,)               restore bias

    compute_dtype:     dtype of the MXU *operands* (accumulation is always f32).
                       Default: bfloat16 (bf16-native MXU on v5e/v6e/v7x).
                       Pass jnp.float32 for exact PyTorch-f32 semantics.
    elementwise_dtype: dtype of the roll/mask tap pipeline. Default: bf16 on v6e/v7x
                       (bf16 VALU), f32 otherwise (v5e has no bf16 VPU/EUP).
    Numerical contract of the bf16 path: y1 is accumulated in f32, rounded once to the
    elementwise dtype, masked (exact 0/1), then rounded to bf16 operands before each dot.
    """
    N, Cin, H, W = x_nchw.shape
    KH, KW, Rin, Rout = wk.shape
    Cout = wr.shape[1]
    if KH % 2 == 0 or KW % 2 == 0:
        # TODO(synk): even kernel sizes with padding=(K-1)//2 change output size; unsupported.
        raise NotImplementedError("only odd kernel sizes ('same' padding) are supported")
    PH, PW = (KH - 1) // 2, (KW - 1) // 2
    HW = H * W
    T = KH * KW
    T8 = T - 1
    # TODO(synk): if HW is not a multiple of 128 (tiny feature maps) stores become masked
    #             partial stores; still correct, just slower.

    kind = _device_kind()
    if compute_dtype is None:
        compute_dtype = jnp.bfloat16
    if np.dtype(compute_dtype) == np.dtype(np.float32):
        elementwise_dtype = jnp.float32            # exact path: everything stays f32
    elif elementwise_dtype is None:
        elementwise_dtype = jnp.bfloat16 if ("v6" in kind or "v7" in kind) else jnp.float32

    cbytes = np.dtype(compute_dtype).itemsize
    ebytes = np.dtype(elementwise_dtype).itemsize
    Rin_p, Rout_p = _round_up(Rin, 8), _round_up(Rout, 8)

    # ---- VMEM / generation aware batch-block sizing -----------------------------------
    vmem_limit, vmem_budget = _vmem_budgets()
    per_image = HW * (2 * Cin * 4                 # x block (double buffered)
                      + 2 * Cout * 4              # out block (double buffered)
                      + Rin_p * ebytes            # y1 slab scratch
                      + T * Rin_p * cbytes        # im2col slab scratch
                      + 2 * max(T8, 1) * ebytes   # tap masks (double buffered)
                      + Rout_p * 4 + Cout * 4)    # core / restore intermediates
    fixed = 2 * cbytes * (Rin_p * Cin + Rout_p * T * Rin_p + Cout * Rout_p) \
            + 2 * 4 * Cout + (2 << 20)            # weights + bias + headroom
    NB = _pick_batch_block(N, per_image, fixed, vmem_budget)
    L = NB * HW
    roll_forward = _pltpu_roll_is_jnp_convention()

    # Free reshape only -- no HBM layout transposes around the kernel.
    x_flat = x_nchw.reshape(N, Cin, HW)

    # ---- tiny one-time weight re-arrangement (channels-first matmuls, 8-padded ranks) --
    wc_p = jnp.pad(jnp.transpose(wc), ((0, Rin_p - Rin), (0, 0))).astype(compute_dtype)
    tap_order = [(PH, PW)] + [(ky, kx) for ky in range(KH) for kx in range(KW)
                              if not (ky == PH and kx == PW)]          # center tap first
    wk_blocks = [jnp.pad(jnp.transpose(wk[ky, kx]),
                         ((0, Rout_p - Rout), (0, Rin_p - Rin))) for ky, kx in tap_order]
    wk2d = jnp.concatenate(wk_blocks, axis=1).astype(compute_dtype)    # (Rout_p, T*Rin_p)
    wr_p = jnp.pad(jnp.transpose(wr), ((0, 0), (0, Rout_p - Rout))).astype(compute_dtype)
    b2 = b.reshape(Cout, 1).astype(jnp.float32)

    # ---- host-precomputed per-tap 0/1 border masks ('same' zero padding), tiled over NB.
    # Invariant: with stride=1 / dilation=1 / odd K / 'same' padding every lane where the
    # circular roll wraps (row, image or slab boundary) is exactly a mask-invalid lane.
    hh, ww = np.meshgrid(np.arange(H), np.arange(W), indexing="ij")
    masks_np = np.zeros((max(T8, 1), 1, L), np.float32)
    for t, (ky, kx) in enumerate(tap_order[1:]):
        dy, dx = ky - PH, kx - PW
        valid = ((hh + dy >= 0) & (hh + dy < H) & (ww + dx >= 0) & (ww + dx < W))
        masks_np[t, 0, :] = np.tile(valid.reshape(-1).astype(np.float32), NB)
    masks = jnp.asarray(masks_np, dtype=elementwise_dtype)

    kernel = functools.partial(
        _musco_tucker_kernel, H=H, W=W, KH=KH, KW=KW, PH=PH, PW=PW, NB=NB, rin_p=Rin_p,
        compute_dtype=compute_dtype, elem_dtype=elementwise_dtype, roll_forward=roll_forward)

    out_flat = pl.pallas_call(
        kernel,
        out_shape=jax.ShapeDtypeStruct((N, Cout, HW), x_nchw.dtype),
        grid_spec=pltpu.PrefetchScalarGridSpec(
            num_scalar_prefetch=0,
            grid=(N // NB,),
            in_specs=[
                pl.BlockSpec((NB, Cin, HW), lambda n: (n, 0, 0)),
                pl.BlockSpec((Rin_p, Cin), lambda n: (0, 0)),
                pl.BlockSpec((Rout_p, T * Rin_p), lambda n: (0, 0)),
                pl.BlockSpec((Cout, Rout_p), lambda n: (0, 0)),
                pl.BlockSpec((Cout, 1), lambda n: (0, 0)),
                pl.BlockSpec((max(T8, 1), 1, L), lambda n: (0, 0, 0)),
            ],
            out_specs=pl.BlockSpec((NB, Cout, HW), lambda n: (n, 0, 0)),
            scratch_shapes=[
                pltpu.VMEM((Rin_p, L), elementwise_dtype),   # compressed-activation slab
                pltpu.VMEM((T * Rin_p, L), compute_dtype),   # im2col columns slab
            ],
        ),
        compiler_params=pltpu.CompilerParams(
            dimension_semantics=("parallel",),               # batch-parallel (2 TCs on v7x)
            vmem_limit_bytes=vmem_limit,
        ),
    )(x_flat, wc_p, wk2d, wr_p, b2, masks)

    return out_flat.reshape(N, Cout, H, W)


def ref_forward(x_nchw, wc, wk, wr, b):
    """Pure-JAX reference: sequential convs exactly like nn.Sequential(compress, core, restore)."""
    dn = ("NCHW", "OIHW", "NCHW")
    wc_oihw = jnp.transpose(wc)[:, :, None, None]          # (Rin, Cin, 1, 1)
    wk_oihw = jnp.transpose(wk, (3, 2, 0, 1))              # (Rout, Rin, KH, KW)
    wr_oihw = jnp.transpose(wr)[:, :, None, None]          # (Cout, Rout, 1, 1)
    ph, pw = (wk.shape[0] - 1) // 2, (wk.shape[1] - 1) // 2
    y = lax.conv_general_dilated(x_nchw, wc_oihw, (1, 1), "VALID", dimension_numbers=dn)
    y = lax.conv_general_dilated(y, wk_oihw, (1, 1), [(ph, ph), (pw, pw)],
                                 dimension_numbers=dn)
    y = lax.conv_general_dilated(y, wr_oihw, (1, 1), "VALID", dimension_numbers=dn)
    return y + b[None, :, None, None]


if __name__ == "__main__":
    # Shapes consistent with MuscoTucker.__init__:
    #   compress: Conv2d(Cin -> Rin, 1x1, no bias)
    #   core:     Conv2d(Rin -> Rout, 3x3, stride 1, pad 1, no bias)
    #   restore:  Conv2d(Rout -> Cout, 1x1, with bias)
    N, Cin, H, W = 2, 8, 16, 16
    Rin, Rout, Cout = 4, 6, 16
    KH = KW = 3

    key = jax.random.PRNGKey(0)
    k1, k2, k3, k4, k5 = jax.random.split(key, 5)
    x = jax.random.normal(k1, (N, Cin, H, W), jnp.float32)
    wc = jax.random.normal(k2, (Cin, Rin), jnp.float32) * 0.2
    wk = jax.random.normal(k3, (KH, KW, Rin, Rout), jnp.float32) * 0.2
    wr = jax.random.normal(k4, (Rout, Cout), jnp.float32) * 0.2
    b = jax.random.normal(k5, (Cout,), jnp.float32) * 0.1

    ref = ref_forward(x, wc, wk, wr, b)

    # 1) f32 MXU operands: exact module semantics.
    out_f32 = jax.block_until_ready(
        musco_tucker_forward(x, wc, wk, wr, b, compute_dtype=jnp.float32))
    assert out_f32.shape == (N, Cout, H, W), out_f32.shape
    np.testing.assert_allclose(np.asarray(out_f32), np.asarray(ref), atol=1e-4, rtol=1e-4)

    # 2) default path: bf16 MXU operands, generation-aware elementwise dtype.
    out_def = jax.block_until_ready(musco_tucker_forward(x, wc, wk, wr, b))
    np.testing.assert_allclose(np.asarray(out_def), np.asarray(ref), atol=5e-2, rtol=5e-2)

    # 3) explicit v5e-style mixed path (bf16 MXU operands, f32 elementwise roll/mask).
    out_mix = jax.block_until_ready(
        musco_tucker_forward(x, wc, wk, wr, b,
                             compute_dtype=jnp.bfloat16, elementwise_dtype=jnp.float32))
    np.testing.assert_allclose(np.asarray(out_mix), np.asarray(ref), atol=5e-2, rtol=5e-2)

    print("KERNEL_OK")
</pallas_src>

<mosaic_0001>
module attributes {stable_mosaic.version = 11 : i64} {
  func.func @_k(%arg0: memref<8x128xf32, #tpu.memory_space<vmem>>, %arg1: memref<8x128xf32, #tpu.memory_space<vmem>>) attributes {dimension_semantics = [], scalar_prefetch = 0 : i64, scratch_operands = 0 : i64, tpu.core_type = #tpu.core_type<tc>} {
    %c0 = arith.constant 0 : index
    %c0_0 = arith.constant 0 : index
    %0 = vector.load %arg0[%c0, %c0_0] : memref<8x128xf32, #tpu.memory_space<vmem>>, vector<8x128xf32>
    %c1_i32 = arith.constant 1 : i32
    %1 = tpu.dynamic_rotate %0 by %c1_i32 dim 1 : vector<8x128xf32>, i32 -> vector<8x128xf32>
    %c0_1 = arith.constant 0 : index
    %c0_2 = arith.constant 0 : index
    %2 = vector.load %arg1[%c0_1, %c0_2] : memref<8x128xf32, #tpu.memory_space<vmem>>, vector<8x128xf32>
    tpu.vector_store %arg1[%c0_1, %c0_2], %1 {strides = array<i32>} : memref<8x128xf32, #tpu.memory_space<vmem>>, vector<8x128xf32>,
    return
  }
}

</mosaic_0001>

<llo_original>
// kernel: tpu_custom_call.1
$region0: #{tpu_custom_call.1}
  #allocation0 [shape = 'u32[]', space=smem, size = 0x4, offset = 0x4, fixed_abs, tag = 'smem constant byte address 0x4 - core index']
  #allocation1 [shape = 'u32[72,128]{1,0:T(1,128)}', space=vmem, size = 0x9000, scoped, tag = 'internal scratch']
  %s0 = inlined_call_operand.hbm [shape: f32[8,128], index: 0, kind: input, shape index: {}]
  %s1 = inlined_call_operand.hbm [shape: f32[8,128], index: 1, kind: output, shape index: {}]
  %s2 = sld [smem:[#allocation0]]
  $region18: #{tpu_custom_call.1} parent=0
    _
  %s4 = ssub.s32 1, %s2
  %s5 = scalar_select 0, %s4, %s2
  $region1: #{tpu_custom_call.1} parent=0
    #allocation2 [shape = 'u8[4096]{0}', space=vmem, size = 0x1000, scoped, tag = 'input window, operand 0, single buffered']
    #allocation3 [shape = 's32[1]{0}', space=sflag, size = 0x4, scoped, tag = 'scoped memory for tpu_custom_call.1']
    #allocation4 [shape = 's32[1]{0}', space=sflag, size = 0x4, scoped, tag = 'scoped memory for tpu_custom_call.1']
    #allocation5 [shape = 'u8[4096]{0}', space=vmem, size = 0x1000, scoped, tag = 'output window, operand 0, single buffered']
    %6 = vsyncpa [#allocation3], 0
    %7 = vsyncpa [#allocation4], 0
    // Predicated region
    $region2: #{tpu_custom_call.1} parent=1 // pred_check
      _
    $region3: #{tpu_custom_call.1} parent=1 // pred_check_branch
      %9 = sbr.rel (0) target = $region5
    $region4: #{tpu_custom_call.1} parent=1 // pred_region
      %11 = vsyncadd [#allocation3], 0
      %s13 = sshll.u32 %s0, 4
      %s14 = int_to_ptr.hbm [resolvable:$true] %s13
      %s15 = sshll.u32 [#allocation2], 4
      %s16 = int_to_ptr.vmem [resolvable:$true] %s15
      %18 = dma.hbm_to_vmem [thread:$0]  %s14, 128, %s16, [#allocation3]
    $region5: #{tpu_custom_call.1} parent=1 // pred_fallthru
      _
    // Predicated region
    $region6: #{tpu_custom_call.1} parent=1 // pred_check
      _
    $region7: #{tpu_custom_call.1} parent=1 // pred_check_branch
      %20 = sbr.rel (0) target = $region9
    $region8: #{tpu_custom_call.1} parent=1 // pred_region
      %22 = dma.done [#allocation3], 128
    $region9: #{tpu_custom_call.1} parent=1 // pred_fallthru
      _
    %v23 = vld [vmem:[#allocation2] sm:$0xff]
    %24 = vrot.lane.b32.xlu0 %v23, 1
    %v25 = vpop.permute.xlu0 %24
    %26 = vst [vmem:[#allocation5] sm:$0xff] %v25
    // Predicated region
    $region10: #{tpu_custom_call.1} parent=1 // pred_check
      _
    $region11: #{tpu_custom_call.1} parent=1 // pred_check_branch
      %28 = sbr.rel (0) target = $region13
    $region12: #{tpu_custom_call.1} parent=1 // pred_region
      %30 = vsyncadd [#allocation4], 0
      %s32 = sshll.u32 [#allocation5], 4
      %s33 = int_to_ptr.vmem [resolvable:$true] %s32
      %s34 = sshll.u32 %s1, 4
      %s35 = int_to_ptr.hbm [resolvable:$true] %s34
      %37 = dma.vmem_to_hbm [thread:$0]  %s33, 128, %s35, [#allocation4]
    $region13: #{tpu_custom_call.1} parent=1 // pred_fallthru
      _
    // Predicated region
    $region14: #{tpu_custom_call.1} parent=1 // pred_check
      _
    $region15: #{tpu_custom_call.1} parent=1 // pred_check_branch
      %39 = sbr.rel (0) target = $region17
    $region16: #{tpu_custom_call.1} parent=1 // pred_region
      %41 = dma.done [#allocation4], 128
    $region17: #{tpu_custom_call.1} parent=1 // pred_fallthru
      _
    %42 = vsyncpa [#allocation3], 1
    %43 = vsyncpa [#allocation4], 1

</llo_original>
